<compile_context>
chip_gen: v6e
topology: v6e:2x2x1
jax: 0.10.0
libtpu: 0.0.40
codegen_flags: <defaults>
</compile_context>

<pallas_src>
import numpy as np
import jax
import jax.numpy as jnp
from jax.experimental import pallas as pl
from jax.experimental.pallas import tpu as pltpu

SELU_ALPHA = 1.6732632423543772
SELU_SCALE = 1.0507009873554805

# ~1 MiB of f32 per (TB, L_pad) block: big enough to amortize per-grid-step
# overhead and give long vector streams, small enough that the double-buffered
# pipeline plus elementwise temporaries fit every generation's scoped VMEM.
_TARGET_BLOCK_ELEMS = 256 * 1024
_VMEM_LIMIT_BYTES = 32 * 1024 * 1024   # <= default scoped limit on v6e/v7x, raises v5e

# (kind, roll shift in position space, stride-mask applied to the layer output).
_LAYERS = (
    ("conv",  1, 0),   # enc1  Conv1d(1,1,3,stride=1,pad=1)
    ("conv",  1, 0),   # enc2  Conv1d(1,1,3,stride=2,pad=1)   (output mask redundant)
    ("conv",  2, 0),   # enc3  Conv1d(1,1,3,stride=2,pad=1)   (output mask redundant)
    ("conv",  4, 8),   # enc4  Conv1d(1,1,3,stride=2,pad=1)   -> keep cols % 8 == 0
    ("convT", 4, 4),   # dec4  ConvTranspose1d(1,1,3,2,1,output_padding=1) -> cols % 4 == 0
    ("convT", 2, 2),   # dec3                                              -> cols % 2 == 0
    ("convT", 1, 0),   # dec2  (length-tail mask only, when L is padded)
    ("conv",  1, 0),   # dec1  Conv1d(1,1,3,stride=1,pad=1), then tanh
)


def _make_kernel(length, l_pad):
    """Builds the kernel for a given true length L and padded length L_pad."""
    need_len = l_pad != length
    n_layers = len(_LAYERS)

    def kernel(x_ref, taps_ref, bias_ref, o_ref):
        tb = x_ref.shape[0]
        h = x_ref[...]                                            # (TB, L_pad) f32
        col = jax.lax.broadcasted_iota(jnp.int32, (tb, l_pad), 1)  # position index

        def shift_down(x, s):   # out[p] = x[p - s], zeros for p < s
            r = pltpu.roll(x, s, axis=1)
            return jnp.where(col >= s, r, 0.0)

        def shift_up(x, s):     # out[p] = x[p + s], zeros for p >= L_pad - s
            r = pltpu.roll(x, l_pad - s, axis=1)
            return jnp.where(col < l_pad - s, r, 0.0)

        def act(x):             # == selu(x) / SELU_SCALE (scale folded into next taps)
            return (jnp.maximum(x, 0.0)
                    + SELU_ALPHA * jnp.exp(jnp.minimum(x, 0.0)) - SELU_ALPHA)

        for li, (kind, s, mstride) in enumerate(_LAYERS):
            w0 = taps_ref[li, 0]
            w1 = taps_ref[li, 1]
            w2 = taps_ref[li, 2]
            b = bias_ref[li]
            d = shift_down(h, s)
            u = shift_up(h, s)
            if kind == "conv":
                # y[p] = w0*x[p-s] + w1*x[p] + w2*x[p+s] + b
                y = w0 * d + w1 * h + w2 * u + b
            else:
                # transposed conv: y[p] = w0*x[p+s] + w1*x[p] + w2*x[p-s] + b
                y = w0 * u + w1 * h + w2 * d + b

            if li < n_layers - 1:
                h = act(y)
                if mstride:
                    # Keep only valid stride positions (and true-length columns
                    # when L was padded) so later layers read exact zeros.
                    keep = (col & (mstride - 1)) == 0
                    if need_len:
                        keep = jnp.logical_and(keep, col < length)
                    h = jnp.where(keep, h, 0.0)
                elif need_len and li == n_layers - 2:
                    # dec2 output: zero the padded tail so dec1's right-neighbour
                    # read at column L sees 0 (conv zero-padding semantics).
                    h = jnp.where(col < length, h, 0.0)
            else:
                h = jnp.tanh(y)

        o_ref[...] = h

    return kernel


def _round_up(a, b):
    return (a + b - 1) // b * b


def ae_super_simple_smaller(x_ncl, taps, biases):
    """x_ncl: (N, 1, L) float32 -> (N, 1, L) float32, matching the PyTorch forward."""
    assert x_ncl.ndim == 3 and x_ncl.shape[1] == 1
    n, _, length = x_ncl.shape
    # With L % 8 == 0 the decoder reconstructs exactly L samples (same as the
    # PyTorch module for such lengths).
    assert length % 8 == 0, "sequence length must be a multiple of 8"

    l_pad = _round_up(length, 128)   # lane-dense stores + clean roll lowering
    # TODO(synk): add sequence tiling with a +-8-column halo for very long L so
    # per-step VMEM stays bounded independent of L.

    # Batch tile: multiple of 8 sublanes, sized to ~_TARGET_BLOCK_ELEMS, and split
    # so a 2-TensorCore chip (v7x) gets >= 2 grid steps when the batch allows it.
    n8 = _round_up(max(n, 1), 8)
    tb = max(8, min(_TARGET_BLOCK_ELEMS // l_pad, 1024) // 8 * 8)
    if tb >= n8:
        tb = n8
        if n8 >= 16:
            tb = _round_up(n8 // 2, 8)
    n_pad = _round_up(n, tb)
    grid = (n_pad // tb,)

    x = jnp.squeeze(x_ncl, axis=1).astype(jnp.float32)           # (N, L), no transpose
    x_p = jnp.pad(x, ((0, n_pad - n), (0, l_pad - length)))      # (Npad, Lpad)

    # Fold the SELU scale of each activation into the *consuming* layer's taps.
    taps_arr = np.stack([np.asarray(t, np.float32) for t in taps]).astype(np.float32)
    taps_arr[1:] *= np.float32(SELU_SCALE)
    taps_arr = jnp.asarray(taps_arr)                             # (8, 3)
    bias_arr = jnp.asarray(np.asarray(biases, np.float32))       # (8,)

    out = pl.pallas_call(
        _make_kernel(length, l_pad),
        out_shape=jax.ShapeDtypeStruct((n_pad, l_pad), jnp.float32),
        grid=grid,
        in_specs=[
            pl.BlockSpec((tb, l_pad), lambda i: (i, 0)),
            pl.BlockSpec(memory_space=pltpu.MemorySpace.SMEM),   # taps (8,3), resident
            pl.BlockSpec(memory_space=pltpu.MemorySpace.SMEM),   # biases (8,), resident
        ],
        out_specs=pl.BlockSpec((tb, l_pad), lambda i: (i, 0)),
        compiler_params=pltpu.CompilerParams(
            dimension_semantics=("parallel",),
            vmem_limit_bytes=_VMEM_LIMIT_BYTES,
        ),
    )(x_p, taps_arr, bias_arr)

    return out[:n, :length][:, None, :]


# ---------------- independent numpy reference (for verification only) ----------

def _np_selu(x):
    return SELU_SCALE * np.where(x > 0, x, SELU_ALPHA * (np.exp(x) - 1.0))


def _np_conv1d(x, w, b, stride, pad=1):
    bsz, l = x.shape
    xp = np.pad(x, ((0, 0), (pad, pad)))
    lo = (l + 2 * pad - 3) // stride + 1
    y = np.zeros((bsz, lo), np.float64)
    for j in range(lo):
        y[:, j] = (xp[:, stride * j] * w[0] + xp[:, stride * j + 1] * w[1]
                   + xp[:, stride * j + 2] * w[2] + b)
    return y


def _np_convT1d(x, w, b, stride=2, pad=1, out_pad=1):
    bsz, li = x.shape
    lo = (li - 1) * stride - 2 * pad + 3 + out_pad
    y = np.zeros((bsz, lo), np.float64)
    for i in range(li):
        for k in range(3):
            t = stride * i + k - pad
            if 0 <= t < lo:
                y[:, t] += x[:, i] * w[k]
    return y + b


def _np_forward(x_ncl, taps, biases):
    x = np.asarray(x_ncl, np.float64)[:, 0, :]
    x = _np_selu(_np_conv1d(x, taps[0], biases[0], 1))
    x = _np_selu(_np_conv1d(x, taps[1], biases[1], 2))
    x = _np_selu(_np_conv1d(x, taps[2], biases[2], 2))
    x = _np_selu(_np_conv1d(x, taps[3], biases[3], 2))
    x = _np_selu(_np_convT1d(x, taps[4], biases[4]))
    x = _np_selu(_np_convT1d(x, taps[5], biases[5]))
    x = _np_selu(_np_convT1d(x, taps[6], biases[6]))
    x = _np_conv1d(x, taps[7], biases[7], 1)
    return np.tanh(x)[:, None, :]


if __name__ == "__main__":
    key = jax.random.PRNGKey(0)
    k_in, k_in2, *k_params = jax.random.split(key, 2 + 16)

    # Deterministic parameter init (Conv1d(1,1,3): fan_in = 3 -> U(-1/sqrt(3), 1/sqrt(3)))
    bound = 1.0 / np.sqrt(3.0)
    taps, biases = [], []
    for li in range(8):
        w = jax.random.uniform(k_params[2 * li], (3,), jnp.float32, -bound, bound)
        b = jax.random.uniform(k_params[2 * li + 1], (), jnp.float32, -bound, bound)
        taps.append(np.asarray(w))
        biases.append(float(b))
    taps_np = [np.asarray(t, np.float32) for t in taps]
    biases_np = np.asarray(biases, np.float32)

    # Lane-dense case: (batch=4, channels=1, seq=128)
    x1 = jax.random.normal(k_in, (4, 1, 128), jnp.float32)
    out1 = jax.block_until_ready(ae_super_simple_smaller(x1, taps_np, biases_np))
    ref1 = _np_forward(np.asarray(x1), taps_np, biases_np)
    assert out1.shape == (4, 1, 128), out1.shape
    np.testing.assert_allclose(np.asarray(out1), ref1, atol=1e-4, rtol=1e-4)

    # Short-sequence case exercising the L -> 128 padding path: (batch=2, seq=16)
    x2 = jax.random.normal(k_in2, (2, 1, 16), jnp.float32)
    out2 = jax.block_until_ready(ae_super_simple_smaller(x2, taps_np, biases_np))
    ref2 = _np_forward(np.asarray(x2), taps_np, biases_np)
    assert out2.shape == (2, 1, 16), out2.shape
    np.testing.assert_allclose(np.asarray(out2), ref2, atol=1e-4, rtol=1e-4)

    print("KERNEL_OK")
</pallas_src>

<mosaic_0001>
module attributes {stable_mosaic.version = 11 : i64} {
  func.func @kernel(%arg0: i32, %arg1: memref<8x128xf32, #tpu.memory_space<vmem>>, %arg2: memref<8x3xf32, #tpu.memory_space<smem>>, %arg3: memref<8xf32, #tpu.memory_space<smem>>, %arg4: memref<8x128xf32, #tpu.memory_space<vmem>>) attributes {dimension_semantics = [#tpu.dimension_semantics<parallel>], iteration_bounds = array<i64: 1>, scalar_prefetch = 0 : i64, scratch_operands = 0 : i64, tpu.core_type = #tpu.core_type<tc>, window_params = [{transform_indices = @transform_0, window_bounds = array<i64: 8, 128>}, {transform_indices = @transform_1, window_bounds = array<i64: 8, 3>}, {transform_indices = @transform_2, window_bounds = array<i64: 8>}, {transform_indices = @transform_3, window_bounds = array<i64: 8, 128>}]} {
    %c0 = arith.constant 0 : index
    %c0_0 = arith.constant 0 : index
    %0 = vector.load %arg1[%c0, %c0_0] : memref<8x128xf32, #tpu.memory_space<vmem>>, vector<8x128xf32>
    %1 = tpu.iota {dimensions = array<i32: 1>} : vector<8x128xi32>
    %c0_1 = arith.constant 0 : index
    %c0_2 = arith.constant 0 : index
    %2 = memref.load %arg2[%c0_1, %c0_2] : memref<8x3xf32, #tpu.memory_space<smem>>
    %c0_3 = arith.constant 0 : index
    %c1 = arith.constant 1 : index
    %3 = memref.load %arg2[%c0_3, %c1] : memref<8x3xf32, #tpu.memory_space<smem>>
    %c0_4 = arith.constant 0 : index
    %c2 = arith.constant 2 : index
    %4 = memref.load %arg2[%c0_4, %c2] : memref<8x3xf32, #tpu.memory_space<smem>>
    %c0_5 = arith.constant 0 : index
    %5 = memref.load %arg3[%c0_5] : memref<8xf32, #tpu.memory_space<smem>>
    %c1_i32 = arith.constant 1 : i32
    %6 = tpu.dynamic_rotate %0 by %c1_i32 dim 1 : vector<8x128xf32>, i32 -> vector<8x128xf32>
    %c1_i32_6 = arith.constant 1 : i32
    %7 = vector.broadcast %c1_i32_6 : i32 to vector<8x128xi32>
    %8 = arith.cmpi sge, %1, %7 : vector<8x128xi32>
    %cst = arith.constant 0.000000e+00 : f32
    %9 = vector.broadcast %cst : f32 to vector<8x128xf32>
    %10 = arith.select %8, %6, %9 : vector<8x128xi1>, vector<8x128xf32>
    %c127_i32 = arith.constant 127 : i32
    %11 = tpu.dynamic_rotate %0 by %c127_i32 dim 1 : vector<8x128xf32>, i32 -> vector<8x128xf32>
    %c127_i32_7 = arith.constant 127 : i32
    %12 = vector.broadcast %c127_i32_7 : i32 to vector<8x128xi32>
    %13 = arith.cmpi slt, %1, %12 : vector<8x128xi32>
    %cst_8 = arith.constant 0.000000e+00 : f32
    %14 = vector.broadcast %cst_8 : f32 to vector<8x128xf32>
    %15 = arith.select %13, %11, %14 : vector<8x128xi1>, vector<8x128xf32>
    %16 = vector.broadcast %2 : f32 to vector<8x128xf32>
    %17 = arith.mulf %16, %10 : vector<8x128xf32>
    %18 = vector.broadcast %3 : f32 to vector<8x128xf32>
    %19 = arith.mulf %18, %0 : vector<8x128xf32>
    %20 = arith.addf %17, %19 : vector<8x128xf32>
    %21 = vector.broadcast %4 : f32 to vector<8x128xf32>
    %22 = arith.mulf %21, %15 : vector<8x128xf32>
    %23 = arith.addf %20, %22 : vector<8x128xf32>
    %24 = vector.broadcast %5 : f32 to vector<8x128xf32>
    %25 = arith.addf %23, %24 : vector<8x128xf32>
    %cst_9 = arith.constant 0.000000e+00 : f32
    %26 = vector.broadcast %cst_9 : f32 to vector<8x128xf32>
    %27 = arith.maximumf %25, %26 : vector<8x128xf32>
    %cst_10 = arith.constant 0.000000e+00 : f32
    %28 = vector.broadcast %cst_10 : f32 to vector<8x128xf32>
    %29 = arith.minimumf %25, %28 : vector<8x128xf32>
    %30 = math.exp %29 : vector<8x128xf32>
    %cst_11 = arith.constant 1.67326319 : f32
    %31 = vector.broadcast %cst_11 : f32 to vector<8x128xf32>
    %32 = arith.mulf %31, %30 : vector<8x128xf32>
    %33 = arith.addf %27, %32 : vector<8x128xf32>
    %cst_12 = arith.constant 1.67326319 : f32
    %34 = vector.broadcast %cst_12 : f32 to vector<8x128xf32>
    %35 = arith.subf %33, %34 : vector<8x128xf32>
    %c1_13 = arith.constant 1 : index
    %c0_14 = arith.constant 0 : index
    %36 = memref.load %arg2[%c1_13, %c0_14] : memref<8x3xf32, #tpu.memory_space<smem>>
    %c1_15 = arith.constant 1 : index
    %c1_16 = arith.constant 1 : index
    %37 = memref.load %arg2[%c1_15, %c1_16] : memref<8x3xf32, #tpu.memory_space<smem>>
    %c1_17 = arith.constant 1 : index
    %c2_18 = arith.constant 2 : index
    %38 = memref.load %arg2[%c1_17, %c2_18] : memref<8x3xf32, #tpu.memory_space<smem>>
    %c1_19 = arith.constant 1 : index
    %39 = memref.load %arg3[%c1_19] : memref<8xf32, #tpu.memory_space<smem>>
    %c1_i32_20 = arith.constant 1 : i32
    %40 = tpu.dynamic_rotate %35 by %c1_i32_20 dim 1 : vector<8x128xf32>, i32 -> vector<8x128xf32>
    %c1_i32_21 = arith.constant 1 : i32
    %41 = vector.broadcast %c1_i32_21 : i32 to vector<8x128xi32>
    %42 = arith.cmpi sge, %1, %41 : vector<8x128xi32>
    %cst_22 = arith.constant 0.000000e+00 : f32
    %43 = vector.broadcast %cst_22 : f32 to vector<8x128xf32>
    %44 = arith.select %42, %40, %43 : vector<8x128xi1>, vector<8x128xf32>
    %c127_i32_23 = arith.constant 127 : i32
    %45 = tpu.dynamic_rotate %35 by %c127_i32_23 dim 1 : vector<8x128xf32>, i32 -> vector<8x128xf32>
    %c127_i32_24 = arith.constant 127 : i32
    %46 = vector.broadcast %c127_i32_24 : i32 to vector<8x128xi32>
    %47 = arith.cmpi slt, %1, %46 : vector<8x128xi32>
    %cst_25 = arith.constant 0.000000e+00 : f32
    %48 = vector.broadcast %cst_25 : f32 to vector<8x128xf32>
    %49 = arith.select %47, %45, %48 : vector<8x128xi1>, vector<8x128xf32>
    %50 = vector.broadcast %36 : f32 to vector<8x128xf32>
    %51 = arith.mulf %50, %44 : vector<8x128xf32>
    %52 = vector.broadcast %37 : f32 to vector<8x128xf32>
    %53 = arith.mulf %52, %35 : vector<8x128xf32>
    %54 = arith.addf %51, %53 : vector<8x128xf32>
    %55 = vector.broadcast %38 : f32 to vector<8x128xf32>
    %56 = arith.mulf %55, %49 : vector<8x128xf32>
    %57 = arith.addf %54, %56 : vector<8x128xf32>
    %58 = vector.broadcast %39 : f32 to vector<8x128xf32>
    %59 = arith.addf %57, %58 : vector<8x128xf32>
    %cst_26 = arith.constant 0.000000e+00 : f32
    %60 = vector.broadcast %cst_26 : f32 to vector<8x128xf32>
    %61 = arith.maximumf %59, %60 : vector<8x128xf32>
    %cst_27 = arith.constant 0.000000e+00 : f32
    %62 = vector.broadcast %cst_27 : f32 to vector<8x128xf32>
    %63 = arith.minimumf %59, %62 : vector<8x128xf32>
    %64 = math.exp %63 : vector<8x128xf32>
    %cst_28 = arith.constant 1.67326319 : f32
    %65 = vector.broadcast %cst_28 : f32 to vector<8x128xf32>
    %66 = arith.mulf %65, %64 : vector<8x128xf32>
    %67 = arith.addf %61, %66 : vector<8x128xf32>
    %cst_29 = arith.constant 1.67326319 : f32
    %68 = vector.broadcast %cst_29 : f32 to vector<8x128xf32>
    %69 = arith.subf %67, %68 : vector<8x128xf32>
    %c2_30 = arith.constant 2 : index
    %c0_31 = arith.constant 0 : index
    %70 = memref.load %arg2[%c2_30, %c0_31] : memref<8x3xf32, #tpu.memory_space<smem>>
    %c2_32 = arith.constant 2 : index
    %c1_33 = arith.constant 1 : index
    %71 = memref.load %arg2[%c2_32, %c1_33] : memref<8x3xf32, #tpu.memory_space<smem>>
    %c2_34 = arith.constant 2 : index
    %c2_35 = arith.constant 2 : index
    %72 = memref.load %arg2[%c2_34, %c2_35] : memref<8x3xf32, #tpu.memory_space<smem>>
    %c2_36 = arith.constant 2 : index
    %73 = memref.load %arg3[%c2_36] : memref<8xf32, #tpu.memory_space<smem>>
    %c2_i32 = arith.constant 2 : i32
    %74 = tpu.dynamic_rotate %69 by %c2_i32 dim 1 : vector<8x128xf32>, i32 -> vector<8x128xf32>
    %c2_i32_37 = arith.constant 2 : i32
    %75 = vector.broadcast %c2_i32_37 : i32 to vector<8x128xi32>
    %76 = arith.cmpi sge, %1, %75 : vector<8x128xi32>
    %cst_38 = arith.constant 0.000000e+00 : f32
    %77 = vector.broadcast %cst_38 : f32 to vector<8x128xf32>
    %78 = arith.select %76, %74, %77 : vector<8x128xi1>, vector<8x128xf32>
    %c126_i32 = arith.constant 126 : i32
    %79 = tpu.dynamic_rotate %69 by %c126_i32 dim 1 : vector<8x128xf32>, i32 -> vector<8x128xf32>
    %c126_i32_39 = arith.constant 126 : i32
    %80 = vector.broadcast %c126_i32_39 : i32 to vector<8x128xi32>
    %81 = arith.cmpi slt, %1, %80 : vector<8x128xi32>
    %cst_40 = arith.constant 0.000000e+00 : f32
    %82 = vector.broadcast %cst_40 : f32 to vector<8x128xf32>
    %83 = arith.select %81, %79, %82 : vector<8x128xi1>, vector<8x128xf32>
    %84 = vector.broadcast %70 : f32 to vector<8x128xf32>
    %85 = arith.mulf %84, %78 : vector<8x128xf32>
    %86 = vector.broadcast %71 : f32 to vector<8x128xf32>
    %87 = arith.mulf %86, %69 : vector<8x128xf32>
    %88 = arith.addf %85, %87 : vector<8x128xf32>
    %89 = vector.broadcast %72 : f32 to vector<8x128xf32>
    %90 = arith.mulf %89, %83 : vector<8x128xf32>
    %91 = arith.addf %88, %90 : vector<8x128xf32>
    %92 = vector.broadcast %73 : f32 to vector<8x128xf32>
    %93 = arith.addf %91, %92 : vector<8x128xf32>
    %cst_41 = arith.constant 0.000000e+00 : f32
    %94 = vector.broadcast %cst_41 : f32 to vector<8x128xf32>
    %95 = arith.maximumf %93, %94 : vector<8x128xf32>
    %cst_42 = arith.constant 0.000000e+00 : f32
    %96 = vector.broadcast %cst_42 : f32 to vector<8x128xf32>
    %97 = arith.minimumf %93, %96 : vector<8x128xf32>
    %98 = math.exp %97 : vector<8x128xf32>
    %cst_43 = arith.constant 1.67326319 : f32
    %99 = vector.broadcast %cst_43 : f32 to vector<8x128xf32>
    %100 = arith.mulf %99, %98 : vector<8x128xf32>
    %101 = arith.addf %95, %100 : vector<8x128xf32>
    %cst_44 = arith.constant 1.67326319 : f32
    %102 = vector.broadcast %cst_44 : f32 to vector<8x128xf32>
    %103 = arith.subf %101, %102 : vector<8x128xf32>
    %c3 = arith.constant 3 : index
    %c0_45 = arith.constant 0 : index
    %104 = memref.load %arg2[%c3, %c0_45] : memref<8x3xf32, #tpu.memory_space<smem>>
    %c3_46 = arith.constant 3 : index
    %c1_47 = arith.constant 1 : index
    %105 = memref.load %arg2[%c3_46, %c1_47] : memref<8x3xf32, #tpu.memory_space<smem>>
    %c3_48 = arith.constant 3 : index
    %c2_49 = arith.constant 2 : index
    %106 = memref.load %arg2[%c3_48, %c2_49] : memref<8x3xf32, #tpu.memory_space<smem>>
    %c3_50 = arith.constant 3 : index
    %107 = memref.load %arg3[%c3_50] : memref<8xf32, #tpu.memory_space<smem>>
    %c4_i32 = arith.constant 4 : i32
    %108 = tpu.dynamic_rotate %103 by %c4_i32 dim 1 : vector<8x128xf32>, i32 -> vector<8x128xf32>
    %c4_i32_51 = arith.constant 4 : i32
    %109 = vector.broadcast %c4_i32_51 : i32 to vector<8x128xi32>
    %110 = arith.cmpi sge, %1, %109 : vector<8x128xi32>
    %cst_52 = arith.constant 0.000000e+00 : f32
    %111 = vector.broadcast %cst_52 : f32 to vector<8x128xf32>
    %112 = arith.select %110, %108, %111 : vector<8x128xi1>, vector<8x128xf32>
    %c124_i32 = arith.constant 124 : i32
    %113 = tpu.dynamic_rotate %103 by %c124_i32 dim 1 : vector<8x128xf32>, i32 -> vector<8x128xf32>
    %c124_i32_53 = arith.constant 124 : i32
    %114 = vector.broadcast %c124_i32_53 : i32 to vector<8x128xi32>
    %115 = arith.cmpi slt, %1, %114 : vector<8x128xi32>
    %cst_54 = arith.constant 0.000000e+00 : f32
    %116 = vector.broadcast %cst_54 : f32 to vector<8x128xf32>
    %117 = arith.select %115, %113, %116 : vector<8x128xi1>, vector<8x128xf32>
    %118 = vector.broadcast %104 : f32 to vector<8x128xf32>
    %119 = arith.mulf %118, %112 : vector<8x128xf32>
    %120 = vector.broadcast %105 : f32 to vector<8x128xf32>
    %121 = arith.mulf %120, %103 : vector<8x128xf32>
    %122 = arith.addf %119, %121 : vector<8x128xf32>
    %123 = vector.broadcast %106 : f32 to vector<8x128xf32>
    %124 = arith.mulf %123, %117 : vector<8x128xf32>
    %125 = arith.addf %122, %124 : vector<8x128xf32>
    %126 = vector.broadcast %107 : f32 to vector<8x128xf32>
    %127 = arith.addf %125, %126 : vector<8x128xf32>
    %cst_55 = arith.constant 0.000000e+00 : f32
    %128 = vector.broadcast %cst_55 : f32 to vector<8x128xf32>
    %129 = arith.maximumf %127, %128 : vector<8x128xf32>
    %cst_56 = arith.constant 0.000000e+00 : f32
    %130 = vector.broadcast %cst_56 : f32 to vector<8x128xf32>
    %131 = arith.minimumf %127, %130 : vector<8x128xf32>
    %132 = math.exp %131 : vector<8x128xf32>
    %cst_57 = arith.constant 1.67326319 : f32
    %133 = vector.broadcast %cst_57 : f32 to vector<8x128xf32>
    %134 = arith.mulf %133, %132 : vector<8x128xf32>
    %135 = arith.addf %129, %134 : vector<8x128xf32>
    %cst_58 = arith.constant 1.67326319 : f32
    %136 = vector.broadcast %cst_58 : f32 to vector<8x128xf32>
    %137 = arith.subf %135, %136 : vector<8x128xf32>
    %c7_i32 = arith.constant 7 : i32
    %138 = vector.broadcast %c7_i32 : i32 to vector<8x128xi32>
    %139 = arith.andi %1, %138 : vector<8x128xi32>
    %c0_i32 = arith.constant 0 : i32
    %140 = vector.broadcast %c0_i32 : i32 to vector<8x128xi32>
    %141 = arith.cmpi eq, %139, %140 : vector<8x128xi32>
    %cst_59 = arith.constant 0.000000e+00 : f32
    %142 = vector.broadcast %cst_59 : f32 to vector<8x128xf32>
    %143 = arith.select %141, %137, %142 : vector<8x128xi1>, vector<8x128xf32>
    %c4 = arith.constant 4 : index
    %c0_60 = arith.constant 0 : index
    %144 = memref.load %arg2[%c4, %c0_60] : memref<8x3xf32, #tpu.memory_space<smem>>
    %c4_61 = arith.constant 4 : index
    %c1_62 = arith.constant 1 : index
    %145 = memref.load %arg2[%c4_61, %c1_62] : memref<8x3xf32, #tpu.memory_space<smem>>
    %c4_63 = arith.constant 4 : index
    %c2_64 = arith.constant 2 : index
    %146 = memref.load %arg2[%c4_63, %c2_64] : memref<8x3xf32, #tpu.memory_space<smem>>
    %c4_65 = arith.constant 4 : index
    %147 = memref.load %arg3[%c4_65] : memref<8xf32, #tpu.memory_space<smem>>
    %c4_i32_66 = arith.constant 4 : i32
    %148 = tpu.dynamic_rotate %143 by %c4_i32_66 dim 1 : vector<8x128xf32>, i32 -> vector<8x128xf32>
    %c4_i32_67 = arith.constant 4 : i32
    %149 = vector.broadcast %c4_i32_67 : i32 to vector<8x128xi32>
    %150 = arith.cmpi sge, %1, %149 : vector<8x128xi32>
    %cst_68 = arith.constant 0.000000e+00 : f32
    %151 = vector.broadcast %cst_68 : f32 to vector<8x128xf32>
    %152 = arith.select %150, %148, %151 : vector<8x128xi1>, vector<8x128xf32>
    %c124_i32_69 = arith.constant 124 : i32
    %153 = tpu.dynamic_rotate %143 by %c124_i32_69 dim 1 : vector<8x128xf32>, i32 -> vector<8x128xf32>
    %c124_i32_70 = arith.constant 124 : i32
    %154 = vector.broadcast %c124_i32_70 : i32 to vector<8x128xi32>
    %155 = arith.cmpi slt, %1, %154 : vector<8x128xi32>
    %cst_71 = arith.constant 0.000000e+00 : f32
    %156 = vector.broadcast %cst_71 : f32 to vector<8x128xf32>
    %157 = arith.select %155, %153, %156 : vector<8x128xi1>, vector<8x128xf32>
    %158 = vector.broadcast %144 : f32 to vector<8x128xf32>
    %159 = arith.mulf %158, %157 : vector<8x128xf32>
    %160 = vector.broadcast %145 : f32 to vector<8x128xf32>
    %161 = arith.mulf %160, %143 : vector<8x128xf32>
    %162 = arith.addf %159, %161 : vector<8x128xf32>
    %163 = vector.broadcast %146 : f32 to vector<8x128xf32>
    %164 = arith.mulf %163, %152 : vector<8x128xf32>
    %165 = arith.addf %162, %164 : vector<8x128xf32>
    %166 = vector.broadcast %147 : f32 to vector<8x128xf32>
    %167 = arith.addf %165, %166 : vector<8x128xf32>
    %cst_72 = arith.constant 0.000000e+00 : f32
    %168 = vector.broadcast %cst_72 : f32 to vector<8x128xf32>
    %169 = arith.maximumf %167, %168 : vector<8x128xf32>
    %cst_73 = arith.constant 0.000000e+00 : f32
    %170 = vector.broadcast %cst_73 : f32 to vector<8x128xf32>
    %171 = arith.minimumf %167, %170 : vector<8x128xf32>
    %172 = math.exp %171 : vector<8x128xf32>
    %cst_74 = arith.constant 1.67326319 : f32
    %173 = vector.broadcast %cst_74 : f32 to vector<8x128xf32>
    %174 = arith.mulf %173, %172 : vector<8x128xf32>
    %175 = arith.addf %169, %174 : vector<8x128xf32>
    %cst_75 = arith.constant 1.67326319 : f32
    %176 = vector.broadcast %cst_75 : f32 to vector<8x128xf32>
    %177 = arith.subf %175, %176 : vector<8x128xf32>
    %c3_i32 = arith.constant 3 : i32
    %178 = vector.broadcast %c3_i32 : i32 to vector<8x128xi32>
    %179 = arith.andi %1, %178 : vector<8x128xi32>
    %c0_i32_76 = arith.constant 0 : i32
    %180 = vector.broadcast %c0_i32_76 : i32 to vector<8x128xi32>
    %181 = arith.cmpi eq, %179, %180 : vector<8x128xi32>
    %cst_77 = arith.constant 0.000000e+00 : f32
    %182 = vector.broadcast %cst_77 : f32 to vector<8x128xf32>
    %183 = arith.select %181, %177, %182 : vector<8x128xi1>, vector<8x128xf32>
    %c5 = arith.constant 5 : index
    %c0_78 = arith.constant 0 : index
    %184 = memref.load %arg2[%c5, %c0_78] : memref<8x3xf32, #tpu.memory_space<smem>>
    %c5_79 = arith.constant 5 : index
    %c1_80 = arith.constant 1 : index
    %185 = memref.load %arg2[%c5_79, %c1_80] : memref<8x3xf32, #tpu.memory_space<smem>>
    %c5_81 = arith.constant 5 : index
    %c2_82 = arith.constant 2 : index
    %186 = memref.load %arg2[%c5_81, %c2_82] : memref<8x3xf32, #tpu.memory_space<smem>>
    %c5_83 = arith.constant 5 : index
    %187 = memref.load %arg3[%c5_83] : memref<8xf32, #tpu.memory_space<smem>>
    %c2_i32_84 = arith.constant 2 : i32
    %188 = tpu.dynamic_rotate %183 by %c2_i32_84 dim 1 : vector<8x128xf32>, i32 -> vector<8x128xf32>
    %c2_i32_85 = arith.constant 2 : i32
    %189 = vector.broadcast %c2_i32_85 : i32 to vector<8x128xi32>
    %190 = arith.cmpi sge, %1, %189 : vector<8x128xi32>
    %cst_86 = arith.constant 0.000000e+00 : f32
    %191 = vector.broadcast %cst_86 : f32 to vector<8x128xf32>
    %192 = arith.select %190, %188, %191 : vector<8x128xi1>, vector<8x128xf32>
    %c126_i32_87 = arith.constant 126 : i32
    %193 = tpu.dynamic_rotate %183 by %c126_i32_87 dim 1 : vector<8x128xf32>, i32 -> vector<8x128xf32>
    %c126_i32_88 = arith.constant 126 : i32
    %194 = vector.broadcast %c126_i32_88 : i32 to vector<8x128xi32>
    %195 = arith.cmpi slt, %1, %194 : vector<8x128xi32>
    %cst_89 = arith.constant 0.000000e+00 : f32
    %196 = vector.broadcast %cst_89 : f32 to vector<8x128xf32>
    %197 = arith.select %195, %193, %196 : vector<8x128xi1>, vector<8x128xf32>
    %198 = vector.broadcast %184 : f32 to vector<8x128xf32>
    %199 = arith.mulf %198, %197 : vector<8x128xf32>
    %200 = vector.broadcast %185 : f32 to vector<8x128xf32>
    %201 = arith.mulf %200, %183 : vector<8x128xf32>
    %202 = arith.addf %199, %201 : vector<8x128xf32>
    %203 = vector.broadcast %186 : f32 to vector<8x128xf32>
    %204 = arith.mulf %203, %192 : vector<8x128xf32>
    %205 = arith.addf %202, %204 : vector<8x128xf32>
    %206 = vector.broadcast %187 : f32 to vector<8x128xf32>
    %207 = arith.addf %205, %206 : vector<8x128xf32>
    %cst_90 = arith.constant 0.000000e+00 : f32
    %208 = vector.broadcast %cst_90 : f32 to vector<8x128xf32>
    %209 = arith.maximumf %207, %208 : vector<8x128xf32>
    %cst_91 = arith.constant 0.000000e+00 : f32
    %210 = vector.broadcast %cst_91 : f32 to vector<8x128xf32>
    %211 = arith.minimumf %207, %210 : vector<8x128xf32>
    %212 = math.exp %211 : vector<8x128xf32>
    %cst_92 = arith.constant 1.67326319 : f32
    %213 = vector.broadcast %cst_92 : f32 to vector<8x128xf32>
    %214 = arith.mulf %213, %212 : vector<8x128xf32>
    %215 = arith.addf %209, %214 : vector<8x128xf32>
    %cst_93 = arith.constant 1.67326319 : f32
    %216 = vector.broadcast %cst_93 : f32 to vector<8x128xf32>
    %217 = arith.subf %215, %216 : vector<8x128xf32>
    %c1_i32_94 = arith.constant 1 : i32
    %218 = vector.broadcast %c1_i32_94 : i32 to vector<8x128xi32>
    %219 = arith.andi %1, %218 : vector<8x128xi32>
    %c0_i32_95 = arith.constant 0 : i32
    %220 = vector.broadcast %c0_i32_95 : i32 to vector<8x128xi32>
    %221 = arith.cmpi eq, %219, %220 : vector<8x128xi32>
    %cst_96 = arith.constant 0.000000e+00 : f32
    %222 = vector.broadcast %cst_96 : f32 to vector<8x128xf32>
    %223 = arith.select %221, %217, %222 : vector<8x128xi1>, vector<8x128xf32>
    %c6 = arith.constant 6 : index
    %c0_97 = arith.constant 0 : index
    %224 = memref.load %arg2[%c6, %c0_97] : memref<8x3xf32, #tpu.memory_space<smem>>
    %c6_98 = arith.constant 6 : index
    %c1_99 = arith.constant 1 : index
    %225 = memref.load %arg2[%c6_98, %c1_99] : memref<8x3xf32, #tpu.memory_space<smem>>
    %c6_100 = arith.constant 6 : index
    %c2_101 = arith.constant 2 : index
    %226 = memref.load %arg2[%c6_100, %c2_101] : memref<8x3xf32, #tpu.memory_space<smem>>
    %c6_102 = arith.constant 6 : index
    %227 = memref.load %arg3[%c6_102] : memref<8xf32, #tpu.memory_space<smem>>
    %c1_i32_103 = arith.constant 1 : i32
    %228 = tpu.dynamic_rotate %223 by %c1_i32_103 dim 1 : vector<8x128xf32>, i32 -> vector<8x128xf32>
    %c1_i32_104 = arith.constant 1 : i32
    %229 = vector.broadcast %c1_i32_104 : i32 to vector<8x128xi32>
    %230 = arith.cmpi sge, %1, %229 : vector<8x128xi32>
    %cst_105 = arith.constant 0.000000e+00 : f32
    %231 = vector.broadcast %cst_105 : f32 to vector<8x128xf32>
    %232 = arith.select %230, %228, %231 : vector<8x128xi1>, vector<8x128xf32>
    %c127_i32_106 = arith.constant 127 : i32
    %233 = tpu.dynamic_rotate %223 by %c127_i32_106 dim 1 : vector<8x128xf32>, i32 -> vector<8x128xf32>
    %c127_i32_107 = arith.constant 127 : i32
    %234 = vector.broadcast %c127_i32_107 : i32 to vector<8x128xi32>
    %235 = arith.cmpi slt, %1, %234 : vector<8x128xi32>
    %cst_108 = arith.constant 0.000000e+00 : f32
    %236 = vector.broadcast %cst_108 : f32 to vector<8x128xf32>
    %237 = arith.select %235, %233, %236 : vector<8x128xi1>, vector<8x128xf32>
    %238 = vector.broadcast %224 : f32 to vector<8x128xf32>
    %239 = arith.mulf %238, %237 : vector<8x128xf32>
    %240 = vector.broadcast %225 : f32 to vector<8x128xf32>
    %241 = arith.mulf %240, %223 : vector<8x128xf32>
    %242 = arith.addf %239, %241 : vector<8x128xf32>
    %243 = vector.broadcast %226 : f32 to vector<8x128xf32>
    %244 = arith.mulf %243, %232 : vector<8x128xf32>
    %245 = arith.addf %242, %244 : vector<8x128xf32>
    %246 = vector.broadcast %227 : f32 to vector<8x128xf32>
    %247 = arith.addf %245, %246 : vector<8x128xf32>
    %cst_109 = arith.constant 0.000000e+00 : f32
    %248 = vector.broadcast %cst_109 : f32 to vector<8x128xf32>
    %249 = arith.maximumf %247, %248 : vector<8x128xf32>
    %cst_110 = arith.constant 0.000000e+00 : f32
    %250 = vector.broadcast %cst_110 : f32 to vector<8x128xf32>
    %251 = arith.minimumf %247, %250 : vector<8x128xf32>
    %252 = math.exp %251 : vector<8x128xf32>
    %cst_111 = arith.constant 1.67326319 : f32
    %253 = vector.broadcast %cst_111 : f32 to vector<8x128xf32>
    %254 = arith.mulf %253, %252 : vector<8x128xf32>
    %255 = arith.addf %249, %254 : vector<8x128xf32>
    %cst_112 = arith.constant 1.67326319 : f32
    %256 = vector.broadcast %cst_112 : f32 to vector<8x128xf32>
    %257 = arith.subf %255, %256 : vector<8x128xf32>
    %c7 = arith.constant 7 : index
    %c0_113 = arith.constant 0 : index
    %258 = memref.load %arg2[%c7, %c0_113] : memref<8x3xf32, #tpu.memory_space<smem>>
    %c7_114 = arith.constant 7 : index
    %c1_115 = arith.constant 1 : index
    %259 = memref.load %arg2[%c7_114, %c1_115] : memref<8x3xf32, #tpu.memory_space<smem>>
    %c7_116 = arith.constant 7 : index
    %c2_117 = arith.constant 2 : index
    %260 = memref.load %arg2[%c7_116, %c2_117] : memref<8x3xf32, #tpu.memory_space<smem>>
    %c7_118 = arith.constant 7 : index
    %261 = memref.load %arg3[%c7_118] : memref<8xf32, #tpu.memory_space<smem>>
    %c1_i32_119 = arith.constant 1 : i32
    %262 = tpu.dynamic_rotate %257 by %c1_i32_119 dim 1 : vector<8x128xf32>, i32 -> vector<8x128xf32>
    %c1_i32_120 = arith.constant 1 : i32
    %263 = vector.broadcast %c1_i32_120 : i32 to vector<8x128xi32>
    %264 = arith.cmpi sge, %1, %263 : vector<8x128xi32>
    %cst_121 = arith.constant 0.000000e+00 : f32
    %265 = vector.broadcast %cst_121 : f32 to vector<8x128xf32>
    %266 = arith.select %264, %262, %265 : vector<8x128xi1>, vector<8x128xf32>
    %c127_i32_122 = arith.constant 127 : i32
    %267 = tpu.dynamic_rotate %257 by %c127_i32_122 dim 1 : vector<8x128xf32>, i32 -> vector<8x128xf32>
    %c127_i32_123 = arith.constant 127 : i32
    %268 = vector.broadcast %c127_i32_123 : i32 to vector<8x128xi32>
    %269 = arith.cmpi slt, %1, %268 : vector<8x128xi32>
    %cst_124 = arith.constant 0.000000e+00 : f32
    %270 = vector.broadcast %cst_124 : f32 to vector<8x128xf32>
    %271 = arith.select %269, %267, %270 : vector<8x128xi1>, vector<8x128xf32>
    %272 = vector.broadcast %258 : f32 to vector<8x128xf32>
    %273 = arith.mulf %272, %266 : vector<8x128xf32>
    %274 = vector.broadcast %259 : f32 to vector<8x128xf32>
    %275 = arith.mulf %274, %257 : vector<8x128xf32>
    %276 = arith.addf %273, %275 : vector<8x128xf32>
    %277 = vector.broadcast %260 : f32 to vector<8x128xf32>
    %278 = arith.mulf %277, %271 : vector<8x128xf32>
    %279 = arith.addf %276, %278 : vector<8x128xf32>
    %280 = vector.broadcast %261 : f32 to vector<8x128xf32>
    %281 = arith.addf %279, %280 : vector<8x128xf32>
    %282 = math.tanh %281 : vector<8x128xf32>
    %c0_125 = arith.constant 0 : index
    %c0_126 = arith.constant 0 : index
    %283 = vector.load %arg4[%c0_125, %c0_126] : memref<8x128xf32, #tpu.memory_space<vmem>>, vector<8x128xf32>
    tpu.vector_store %arg4[%c0_125, %c0_126], %282 {strides = array<i32>} : memref<8x128xf32, #tpu.memory_space<vmem>>, vector<8x128xf32>,
    return
  }
  func.func @transform_0(%arg0: i32) -> (i32, i32) {
    %c0_i32 = arith.constant 0 : i32
    %c0_i32_0 = arith.constant 0 : i32
    return %arg0, %c0_i32 : i32, i32
  }
  func.func @transform_1(%arg0: i32) -> (i32, i32) {
    %c0_i32 = arith.constant 0 : i32
    %c0_i32_0 = arith.constant 0 : i32
    %c0_i32_1 = arith.constant 0 : i32
    return %c0_i32, %c0_i32_0 : i32, i32
  }
  func.func @transform_2(%arg0: i32) -> i32 {
    %c0_i32 = arith.constant 0 : i32
    %c0_i32_0 = arith.constant 0 : i32
    return %c0_i32 : i32
  }
  func.func @transform_3(%arg0: i32) -> (i32, i32) {
    %c0_i32 = arith.constant 0 : i32
    %c0_i32_0 = arith.constant 0 : i32
    return %arg0, %c0_i32 : i32, i32
  }
}

</mosaic_0001>

<llo_original>
// kernel: tpu_custom_call.1
$region0: #{tpu_custom_call.1}
  #allocation0 [shape = 'u32[]', space=smem, size = 0x4, offset = 0x4, fixed_abs, tag = 'smem constant byte address 0x4 - core index']
  #allocation1 [shape = 'u32[144,128]{1,0:T(1,128)}', space=vmem, size = 0x12000, scoped, tag = 'internal scratch']
  %s0 = inlined_call_operand.vmem [shape: f32[8,128], index: 0, kind: input, shape index: {}]
  %s1 = inlined_call_operand.vmem [shape: f32[8,3], index: 1, kind: input, shape index: {}]
  %s2 = inlined_call_operand.vmem [shape: f32[8], index: 2, kind: input, shape index: {}]
  %s3 = inlined_call_operand.hbm [shape: f32[8,128], index: 3, kind: output, shape index: {}]
  %s4 = sld [smem:[#allocation0]]
  $region30: #{tpu_custom_call.1} parent=0
    _
  %s6 = ssub.s32 1, %s4
  %s7 = scalar_select 0, %s6, %s4
  $region1: #{tpu_custom_call.1} parent=0
    #allocation2 [shape = 'u8[4096]{0}', space=smem, size = 0x1000, scoped, tag = 'input window, operand 1, single buffered']
    #allocation3 [shape = 's32[1]{0}', space=sflag, size = 0x4, scoped, tag = 'scoped memory for tpu_custom_call.1']
    #allocation4 [shape = 's32[1]{0}', space=sflag, size = 0x4, scoped, tag = 'scoped memory for tpu_custom_call.1']
    #allocation5 [shape = 'u8[512]{0}', space=smem, size = 0x200, scoped, tag = 'input window, operand 2, single buffered']
    #allocation6 [shape = 's32[1]{0}', space=sflag, size = 0x4, scoped, tag = 'scoped memory for tpu_custom_call.1']
    #allocation7 [shape = 'u8[4096]{0}', space=vmem, size = 0x1000, scoped, tag = 'output window, operand 0, single buffered']
    %8 = vsyncpa [#allocation4], 0
    %9 = vsyncpa [#allocation6], 0
    %10 = vsyncpa [#allocation3], 0
    // Predicated region
    $region2: #{tpu_custom_call.1} parent=1 // pred_check
      _
    $region3: #{tpu_custom_call.1} parent=1 // pred_check_branch
      %12 = sbr.rel (0) target = $region5
    $region4: #{tpu_custom_call.1} parent=1 // pred_region
      _
    $region5: #{tpu_custom_call.1} parent=1 // pred_fallthru
      _
    // Predicated region
    $region6: #{tpu_custom_call.1} parent=1 // pred_check
      _
    $region7: #{tpu_custom_call.1} parent=1 // pred_check_branch
      %14 = sbr.rel (0) target = $region9
    $region8: #{tpu_custom_call.1} parent=1 // pred_region
      %s16 = ssub.s32 128, 128
      %17 = vsyncadd [#allocation4], %s16
      %s19 = sshll.u32 %s1, 4
      %s20 = int_to_ptr.vmem [resolvable:$true] %s19
      %22 = dma.vmem_to_smem %s20, 128, [#allocation2], [#allocation4]
    $region9: #{tpu_custom_call.1} parent=1 // pred_fallthru
      _
    // Predicated region
    $region10: #{tpu_custom_call.1} parent=1 // pred_check
      _
    $region11: #{tpu_custom_call.1} parent=1 // pred_check_branch
      %24 = sbr.rel (0) target = $region13
    $region12: #{tpu_custom_call.1} parent=1 // pred_region
      %s26 = ssub.s32 16, 16
      %27 = vsyncadd [#allocation6], %s26
      %s29 = sshll.u32 %s2, 4
      %s30 = int_to_ptr.vmem [resolvable:$true] %s29
      %32 = dma.vmem_to_smem %s30, 16, [#allocation5], [#allocation6]
    $region13: #{tpu_custom_call.1} parent=1 // pred_fallthru
      _
    // Predicated region
    $region14: #{tpu_custom_call.1} parent=1 // pred_check
      _
    $region15: #{tpu_custom_call.1} parent=1 // pred_check_branch
      %34 = sbr.rel (0) target = $region17
    $region16: #{tpu_custom_call.1} parent=1 // pred_region
      %35 = dma.done [#allocation4], 128
    $region17: #{tpu_custom_call.1} parent=1 // pred_fallthru
      _
    // Predicated region
    $region18: #{tpu_custom_call.1} parent=1 // pred_check
      _
    $region19: #{tpu_custom_call.1} parent=1 // pred_check_branch
      %37 = sbr.rel (0) target = $region21
    $region20: #{tpu_custom_call.1} parent=1 // pred_region
      %38 = dma.done [#allocation6], 16
    $region21: #{tpu_custom_call.1} parent=1 // pred_fallthru
      _
    %39 = sfence
    %v40 = vld [vmem:[%s0] sm:$0xff]
    %v41 = vlaneseq
    %v42 = vand.u32 %v41, 127
    %s43 = sld [smem:[#allocation2]]
    %s44 = sld [smem:[#allocation2 + $0x1]]
    %s45 = sld [smem:[#allocation2 + $0x2]]
    %s46 = sld [smem:[#allocation5]]
    %47 = vrot.lane.b32.xlu0 %v40, 1
    %v48 = vpop.permute.xlu0 %47
    %vm49 = vcmp.ge.s32.totalorder %v42, 1
    %v50 = vsel %vm49, %v48, 0.0
    %51 = vrot.lane.b32.xlu0 %v40, 127
    %v52 = vpop.permute.xlu0 %51
    %vm53 = vcmp.lt.s32.totalorder %v42, 127
    %v54 = vsel %vm53, %v52, 0.0
    %v55 = vstv %s43
    %v56 = vmul.f32 %v55, %v50
    %v57 = vstv %s44
    %v58 = vmul.f32 %v57, %v40
    %v59 = vadd.f32 %v56, %v58
    %v60 = vstv %s45
    %v61 = vmul.f32 %v60, %v54
    %v62 = vadd.f32 %v59, %v61
    %v63 = vstv %s46
    %v64 = vadd.f32 %v62, %v63
    %v65 = vmax.f32 %v64, 0.0
    %v66 = vmin.f32 %v64, 0.0
    %v67 = vmul.f32 %v66, 1.442695
    %v68 = vpow.pop %v67
    %v69 = vmul.f32 %v68, 1.6732632
    %v70 = vadd.f32 %v65, %v69
    %v71 = vsub.f32 %v70, 1.6732632
    %s72 = sld [smem:[#allocation2 + $0x80]]
    %s73 = sld [smem:[#allocation2 + $0x81]]
    %s74 = sld [smem:[#allocation2 + $0x82]]
    %s75 = sld [smem:[#allocation5 + $0x1]]
    %76 = vrot.lane.b32.xlu0 %v71, 1
    %v77 = vpop.permute.xlu0 %76
    %v78 = vsel %vm49, %v77, 0.0
    %79 = vrot.lane.b32.xlu0 %v71, 127
    %v80 = vpop.permute.xlu0 %79
    %v81 = vsel %vm53, %v80, 0.0
    %v82 = vstv %s72
    %v83 = vmul.f32 %v82, %v78
    %v84 = vstv %s73
    %v85 = vmul.f32 %v84, %v71
    %v86 = vadd.f32 %v83, %v85
    %v87 = vstv %s74
    %v88 = vmul.f32 %v87, %v81
    %v89 = vadd.f32 %v86, %v88
    %v90 = vstv %s75
    %v91 = vadd.f32 %v89, %v90
    %v92 = vmax.f32 %v91, 0.0
    %v93 = vmin.f32 %v91, 0.0
    %v94 = vmul.f32 %v93, 1.442695
    %v95 = vpow.pop %v94
    %v96 = vmul.f32 %v95, 1.6732632
    %v97 = vadd.f32 %v92, %v96
    %v98 = vsub.f32 %v97, 1.6732632
    %s99 = sld [smem:[#allocation2 + $0x100]]
    %s100 = sld [smem:[#allocation2 + $0x101]]
    %s101 = sld [smem:[#allocation2 + $0x102]]
    %s102 = sld [smem:[#allocation5 + $0x2]]
    %103 = vrot.lane.b32.xlu0 %v98, 2
    %v104 = vpop.permute.xlu0 %103
    %vm105 = vcmp.ge.s32.totalorder %v42, 2
    %v106 = vsel %vm105, %v104, 0.0
    %107 = vrot.lane.b32.xlu0 %v98, 126
    %v108 = vpop.permute.xlu0 %107
    %vm109 = vcmp.lt.s32.totalorder %v42, 126
    %v110 = vsel %vm109, %v108, 0.0
    %v111 = vstv %s99
    %v112 = vmul.f32 %v111, %v106
    %v113 = vstv %s100
    %v114 = vmul.f32 %v113, %v98
    %v115 = vadd.f32 %v112, %v114
    %v116 = vstv %s101
    %v117 = vmul.f32 %v116, %v110
    %v118 = vadd.f32 %v115, %v117
    %v119 = vstv %s102
    %v120 = vadd.f32 %v118, %v119
    %v121 = vmax.f32 %v120, 0.0
    %v122 = vmin.f32 %v120, 0.0
    %v123 = vmul.f32 %v122, 1.442695
    %v124 = vpow.pop %v123
    %v125 = vmul.f32 %v124, 1.6732632
    %v126 = vadd.f32 %v121, %v125
    %v127 = vsub.f32 %v126, 1.6732632
    %s128 = sld [smem:[#allocation2 + $0x180]]
    %s129 = sld [smem:[#allocation2 + $0x181]]
    %s130 = sld [smem:[#allocation2 + $0x182]]
    %s131 = sld [smem:[#allocation5 + $0x3]]
    %132 = vrot.lane.b32.xlu0 %v127, 4
    %v133 = vpop.permute.xlu0 %132
    %vm134 = vcmp.ge.s32.totalorder %v42, 4
    %v135 = vsel %vm134, %v133, 0.0
    %136 = vrot.lane.b32.xlu0 %v127, 124
    %v137 = vpop.permute.xlu0 %136
    %vm138 = vcmp.lt.s32.totalorder %v42, 124
    %v139 = vsel %vm138, %v137, 0.0
    %v140 = vstv %s128
    %v141 = vmul.f32 %v140, %v135
    %v142 = vstv %s129
    %v143 = vmul.f32 %v142, %v127
    %v144 = vadd.f32 %v141, %v143
    %v145 = vstv %s130
    %v146 = vmul.f32 %v145, %v139
    %v147 = vadd.f32 %v144, %v146
    %v148 = vstv %s131
    %v149 = vadd.f32 %v147, %v148
    %v150 = vmax.f32 %v149, 0.0
    %v151 = vmin.f32 %v149, 0.0
    %v152 = vmul.f32 %v151, 1.442695
    %v153 = vpow.pop %v152
    %v154 = vmul.f32 %v153, 1.6732632
    %v155 = vadd.f32 %v150, %v154
    %v156 = vsub.f32 %v155, 1.6732632
    %v157 = vand.u32 %v42, 7
    %vm158 = vcmp.eq.s32.totalorder %v157, 0
    %v159 = vsel %vm158, %v156, 0.0
    %s160 = sld [smem:[#allocation2 + $0x200]]
    %s161 = sld [smem:[#allocation2 + $0x201]]
    %s162 = sld [smem:[#allocation2 + $0x202]]
    %s163 = sld [smem:[#allocation5 + $0x4]]
    %164 = vrot.lane.b32.xlu0 %v159, 4
    %v165 = vpop.permute.xlu0 %164
    %v166 = vsel %vm134, %v165, 0.0
    %167 = vrot.lane.b32.xlu0 %v159, 124
    %v168 = vpop.permute.xlu0 %167
    %v169 = vsel %vm138, %v168, 0.0
    %v170 = vstv %s160
    %v171 = vmul.f32 %v170, %v169
    %v172 = vstv %s161
    %v173 = vmul.f32 %v172, %v159
    %v174 = vadd.f32 %v171, %v173
    %v175 = vstv %s162
    %v176 = vmul.f32 %v175, %v166
    %v177 = vadd.f32 %v174, %v176
    %v178 = vstv %s163
    %v179 = vadd.f32 %v177, %v178
    %v180 = vmax.f32 %v179, 0.0
    %v181 = vmin.f32 %v179, 0.0
    %v182 = vmul.f32 %v181, 1.442695
    %v183 = vpow.pop %v182
    %v184 = vmul.f32 %v183, 1.6732632
    %v185 = vadd.f32 %v180, %v184
    %v186 = vsub.f32 %v185, 1.6732632
    %v187 = vand.u32 %v42, 3
    %vm188 = vcmp.eq.s32.totalorder %v187, 0
    %v189 = vsel %vm188, %v186, 0.0
    %s190 = sld [smem:[#allocation2 + $0x280]]
    %s191 = sld [smem:[#allocation2 + $0x281]]
    %s192 = sld [smem:[#allocation2 + $0x282]]
    %s193 = sld [smem:[#allocation5 + $0x5]]
    %194 = vrot.lane.b32.xlu0 %v189, 2
    %v195 = vpop.permute.xlu0 %194
    %v196 = vsel %vm105, %v195, 0.0
    %197 = vrot.lane.b32.xlu0 %v189, 126
    %v198 = vpop.permute.xlu0 %197
    %v199 = vsel %vm109, %v198, 0.0
    %v200 = vstv %s190
    %v201 = vmul.f32 %v200, %v199
    %v202 = vstv %s191
    %v203 = vmul.f32 %v202, %v189
    %v204 = vadd.f32 %v201, %v203
    %v205 = vstv %s192
    %v206 = vmul.f32 %v205, %v196
    %v207 = vadd.f32 %v204, %v206
    %v208 = vstv %s193
    %v209 = vadd.f32 %v207, %v208
    %v210 = vmax.f32 %v209, 0.0
    %v211 = vmin.f32 %v209, 0.0
    %v212 = vmul.f32 %v211, 1.442695
    %v213 = vpow.pop %v212
    %v214 = vmul.f32 %v213, 1.6732632
    %v215 = vadd.f32 %v210, %v214
    %v216 = vsub.f32 %v215, 1.6732632
    %v217 = vand.u32 %v42, 1
    %vm218 = vcmp.eq.s32.totalorder %v217, 0
    %v219 = vsel %vm218, %v216, 0.0
    %s220 = sld [smem:[#allocation2 + $0x300]]
    %s221 = sld [smem:[#allocation2 + $0x301]]
    %s222 = sld [smem:[#allocation2 + $0x302]]
    %s223 = sld [smem:[#allocation5 + $0x6]]
    %224 = vrot.lane.b32.xlu0 %v219, 1
    %v225 = vpop.permute.xlu0 %224
    %v226 = vsel %vm49, %v225, 0.0
    %227 = vrot.lane.b32.xlu0 %v219, 127
    %v228 = vpop.permute.xlu0 %227
    %v229 = vsel %vm53, %v228, 0.0
    %v230 = vstv %s220
    %v231 = vmul.f32 %v230, %v229
    %v232 = vstv %s221
    %v233 = vmul.f32 %v232, %v219
    %v234 = vadd.f32 %v231, %v233
    %v235 = vstv %s222
    %v236 = vmul.f32 %v235, %v226
    %v237 = vadd.f32 %v234, %v236
    %v238 = vstv %s223
    %v239 = vadd.f32 %v237, %v238
    %v240 = vmax.f32 %v239, 0.0
    %v241 = vmin.f32 %v239, 0.0
    %v242 = vmul.f32 %v241, 1.442695
    %v243 = vpow.pop %v242
    %v244 = vmul.f32 %v243, 1.6732632
    %v245 = vadd.f32 %v240, %v244
    %v246 = vsub.f32 %v245, 1.6732632
    %s247 = sld [smem:[#allocation2 + $0x380]]
    %s248 = sld [smem:[#allocation2 + $0x381]]
    %s249 = sld [smem:[#allocation2 + $0x382]]
    %s250 = sld [smem:[#allocation5 + $0x7]]
    %251 = vrot.lane.b32.xlu0 %v246, 1
    %v252 = vpop.permute.xlu0 %251
    %v253 = vsel %vm49, %v252, 0.0
    %254 = vrot.lane.b32.xlu0 %v246, 127
    %v255 = vpop.permute.xlu0 %254
    %v256 = vsel %vm53, %v255, 0.0
    %v257 = vstv %s247
    %v258 = vmul.f32 %v257, %v253
    %v259 = vstv %s248
    %v260 = vmul.f32 %v259, %v246
    %v261 = vadd.f32 %v258, %v260
    %v262 = vstv %s249
    %v263 = vmul.f32 %v262, %v256
    %v264 = vadd.f32 %v261, %v263
    %v265 = vstv %s250
    %v266 = vadd.f32 %v264, %v265
    %v267 = vtanh.pop %v266
    %268 = vst [vmem:[#allocation7] sm:$0xff] %v267
    // Predicated region
    $region22: #{tpu_custom_call.1} parent=1 // pred_check
      _
    $region23: #{tpu_custom_call.1} parent=1 // pred_check_branch
      %270 = sbr.rel (0) target = $region25
    $region24: #{tpu_custom_call.1} parent=1 // pred_region
      %s272 = ssub.s32 128, 128
      %273 = vsyncadd [#allocation3], %s272
      %s275 = sshll.u32 [#allocation7], 4
      %s276 = int_to_ptr.vmem [resolvable:$true] %s275
      %278 = dma.vmem_to_hbm [thread:$0]  %s276, 128, %s3, [#allocation3]
    $region25: #{tpu_custom_call.1} parent=1 // pred_fallthru
      _
    // Predicated region
    $region26: #{tpu_custom_call.1} parent=1 // pred_check
      _
    $region27: #{tpu_custom_call.1} parent=1 // pred_check_branch
      %280 = sbr.rel (0) target = $region29
    $region28: #{tpu_custom_call.1} parent=1 // pred_region
      %281 = dma.done [#allocation3], 128
    $region29: #{tpu_custom_call.1} parent=1 // pred_fallthru
      _
    %282 = vsyncpa [#allocation3], 1
    %283 = vsyncpa [#allocation4], 1
    %284 = vsyncpa [#allocation6], 1

</llo_original>
